<compile_context>
chip_gen: v6e
topology: v6e:2x2x1
jax: 0.10.0
libtpu: 0.0.40
codegen_flags: <defaults>
</compile_context>

<pallas_src>
import functools

import jax
import jax.numpy as jnp
from jax.experimental import pallas as pl
from jax.experimental.pallas import tpu as pltpu


# ---------------------------------------------------------------------------
# Kernel bodies (each grid step handles one (tm, .) row tile).
# ---------------------------------------------------------------------------
def _feat_proj_kernel(feat_ref, w1_ref, out_ref):
    """F1 row block = Feat_block @ W1   (f32 accumulate, bf16 out)."""
    out_ref[...] = jnp.dot(
        feat_ref[...], w1_ref[...], preferred_element_type=jnp.float32
    ).astype(out_ref.dtype)


def _scaled_inverse_kernel(phi_inv_ref, x_ref, d_ref, out_ref):
    """A row block = g_block * (Phi_inv_block @ X)  (diag filter on rows)."""
    acc = jnp.dot(phi_inv_ref[...], x_ref[...],
                  preferred_element_type=jnp.float32)          # (tm, K) f32
    out_ref[...] = (d_ref[...] * acc).astype(out_ref.dtype)


def _layer1_out_kernel(phi_ref, a1_ref, w2_ref, out_ref):
    """F2 row block = relu(Phi_block @ A1) @ W2_pad (H1 is never materialized)."""
    h1 = jnp.maximum(
        jnp.dot(phi_ref[...], a1_ref[...], preferred_element_type=jnp.float32),
        0.0)
    # TODO(synk): dropout on H1 omitted (inference / training=False semantics).
    out_ref[...] = jnp.dot(
        h1.astype(w2_ref.dtype), w2_ref[...],
        preferred_element_type=jnp.float32).astype(out_ref.dtype)


def _layer2_out_kernel(phi_ref, a2_ref, out_ref, *, num_classes):
    """log_softmax(Phi_block @ A2) over the lane-padded class axis."""
    l2 = jnp.dot(phi_ref[...], a2_ref[...],
                 preferred_element_type=jnp.float32)           # (tm, Cp) f32
    cols = jax.lax.broadcasted_iota(jnp.int32, l2.shape, dimension=1)
    l2 = jnp.where(cols < num_classes, l2, -jnp.inf)           # mask lane padding
    m = jnp.max(l2, axis=1, keepdims=True)
    z = l2 - m
    lse = jnp.log(jnp.sum(jnp.exp(z), axis=1, keepdims=True))
    out_ref[...] = z - lse


# ---------------------------------------------------------------------------
# Wrapper: five row-tiled streaming pallas_calls.
# ---------------------------------------------------------------------------
def _round_up(x, m):
    return ((x + m - 1) // m) * m


def _row_spec(tm, ncols):
    return pl.BlockSpec((tm, ncols), lambda i: (i, 0))


def _resident_spec(nrows, ncols):
    return pl.BlockSpec((nrows, ncols), lambda i: (0, 0))


def gwnn_forward_pallas(phi, phi_inv, d1, d2, feat, w1, w2, *, tm=256):
    n = phi.shape[0]
    f = feat.shape[1]
    h = w1.shape[1]
    c = w2.shape[1]
    cp = max(128, _round_up(c, 128))           # lane-dense padded class width

    # Row-tile size: multiple of 16 (bf16 sublane packing), capped at N.
    tm = max(16, min(tm, _round_up(n, 16)))
    tm = _round_up(tm, 16)
    np_ = _round_up(n, tm)
    grid = (np_ // tm,)

    def pad2(x, rows, cols):
        pr, pc = rows - x.shape[0], cols - x.shape[1]
        return x if (pr == 0 and pc == 0) else jnp.pad(x, ((0, pr), (0, pc)))

    # bf16 streaming of the big operators / features; f32 MXU accumulation.
    phi_bf = pad2(phi, np_, np_).astype(jnp.bfloat16)
    phi_inv_bf = pad2(phi_inv, np_, np_).astype(jnp.bfloat16)
    feat_bf = pad2(feat, np_, f).astype(jnp.bfloat16)
    w1_bf = w1.astype(jnp.bfloat16)
    w2p_bf = pad2(w2, h, cp).astype(jnp.bfloat16)      # zero-padded class cols
    d1_col = pad2(d1.reshape(-1, 1).astype(jnp.float32), np_, 1)
    d2_col = pad2(d2.reshape(-1, 1).astype(jnp.float32), np_, 1)

    cparams = pltpu.CompilerParams(
        dimension_semantics=("parallel",),     # row blocks shard across TCs (v7x)
        vmem_limit_bytes=48 * 1024 * 1024,     # headroom; fits v7x's 64 MiB VMEM
    )

    # Pass 0: F1 = Feat @ W1                                           (N, H)
    f1 = pl.pallas_call(
        _feat_proj_kernel,
        grid=grid,
        in_specs=[_row_spec(tm, f), _resident_spec(f, h)],
        out_specs=_row_spec(tm, h),
        out_shape=jax.ShapeDtypeStruct((np_, h), jnp.bfloat16),
        compiler_params=cparams,
    )(feat_bf, w1_bf)

    # Pass 1: A1 = g1 * (Phi_inv @ F1)        -- streams Phi_inv (1st read)
    a1 = pl.pallas_call(
        _scaled_inverse_kernel,
        grid=grid,
        in_specs=[_row_spec(tm, np_), _resident_spec(np_, h), _row_spec(tm, 1)],
        out_specs=_row_spec(tm, h),
        out_shape=jax.ShapeDtypeStruct((np_, h), jnp.bfloat16),
        compiler_params=cparams,
    )(phi_inv_bf, f1, d1_col)

    # Pass 2: F2 = relu(Phi @ A1) @ W2_pad    -- streams Phi (1st read)
    f2 = pl.pallas_call(
        _layer1_out_kernel,
        grid=grid,
        in_specs=[_row_spec(tm, np_), _resident_spec(np_, h),
                  _resident_spec(h, cp)],
        out_specs=_row_spec(tm, cp),
        out_shape=jax.ShapeDtypeStruct((np_, cp), jnp.bfloat16),
        compiler_params=cparams,
    )(phi_bf, a1, w2p_bf)

    # Pass 3: A2 = g2 * (Phi_inv @ F2)        -- streams Phi_inv (2nd read)
    a2 = pl.pallas_call(
        _scaled_inverse_kernel,
        grid=grid,
        in_specs=[_row_spec(tm, np_), _resident_spec(np_, cp), _row_spec(tm, 1)],
        out_specs=_row_spec(tm, cp),
        out_shape=jax.ShapeDtypeStruct((np_, cp), jnp.bfloat16),
        compiler_params=cparams,
    )(phi_inv_bf, f2, d2_col)

    # Pass 4: log_softmax(Phi @ A2, dim=1)    -- streams Phi (2nd read)
    logp = pl.pallas_call(
        functools.partial(_layer2_out_kernel, num_classes=c),
        grid=grid,
        in_specs=[_row_spec(tm, np_), _resident_spec(np_, cp)],
        out_specs=_row_spec(tm, cp),
        out_shape=jax.ShapeDtypeStruct((np_, cp), jnp.float32),
        compiler_params=cparams,
    )(phi_bf, a2)

    return logp[:n, :c]


# ----------------------------- glue (plain JAX) -----------------------------
def coo_to_dense(indices, values, shape):
    """Densify a COO sparse matrix (duplicates are summed, like coalescing)."""
    dense = jnp.zeros(shape, jnp.float32)
    return dense.at[indices[0], indices[1]].add(values)


def gwnn_forward(phi_indices, phi_values, phi_inverse_indices,
                 phi_inverse_values, feature_indices, feature_values, params,
                 ncount, feature_number):
    phi = coo_to_dense(phi_indices, phi_values, (ncount, ncount))
    phi_inv = coo_to_dense(phi_inverse_indices, phi_inverse_values,
                           (ncount, ncount))
    feat = coo_to_dense(feature_indices, feature_values,
                        (ncount, feature_number))
    return gwnn_forward_pallas(phi, phi_inv,
                               params["d1"], params["d2"],
                               feat, params["w1"], params["w2"])


def xavier_uniform(key, shape):
    fan_in, fan_out = shape
    limit = jnp.sqrt(6.0 / (fan_in + fan_out))
    return jax.random.uniform(key, shape, jnp.float32, -limit, limit)


if __name__ == "__main__":
    # Small shapes consistent with the module.
    N = 128        # ncount (nodes)
    F = 16         # feature_number
    H = 32         # args.filters
    C = 8          # class_number

    key = jax.random.PRNGKey(0)
    ks = jax.random.split(key, 10)

    # Deterministic parameters (match the module's init scheme).
    params = {
        "w1": xavier_uniform(ks[0], (F, H)),
        "w2": xavier_uniform(ks[1], (H, C)),
        "d1": jax.random.uniform(ks[2], (1, N), jnp.float32, 0.9, 1.1),
        "d2": jax.random.uniform(ks[3], (1, N), jnp.float32, 0.9, 1.1),
    }

    # Synthetic sparse (COO) inputs: wavelet basis, its inverse, node features.
    nnz_phi = 512
    nnz_feat = 256
    phi_indices = jax.random.randint(ks[4], (2, nnz_phi), 0, N)
    phi_values = jax.random.uniform(ks[5], (nnz_phi,), jnp.float32, -1.0, 1.0)
    phi_inverse_indices = jax.random.randint(ks[6], (2, nnz_phi), 0, N)
    phi_inverse_values = jax.random.uniform(ks[7], (nnz_phi,), jnp.float32,
                                            -1.0, 1.0)
    feature_indices = jnp.stack([
        jax.random.randint(ks[8], (nnz_feat,), 0, N),
        jax.random.randint(ks[9], (nnz_feat,), 0, F),
    ])
    feature_values = jnp.ones((nnz_feat,), jnp.float32)

    preds = gwnn_forward(phi_indices, phi_values,
                         phi_inverse_indices, phi_inverse_values,
                         feature_indices, feature_values,
                         params, N, F)
    preds = jax.block_until_ready(preds)

    assert preds.shape == (N, C)
    assert bool(jnp.all(jnp.isfinite(preds)))
    # rows of log_softmax must (log-)sum to ~0
    assert bool(jnp.allclose(jnp.sum(jnp.exp(preds), axis=1), 1.0, atol=1e-4))
    print("KERNEL_OK")
</pallas_src>

<mosaic_0001>
module attributes {stable_mosaic.version = 11 : i64} {
  func.func @_feat_proj_kernel(%arg0: i32, %arg1: memref<128x16xbf16, #tpu.memory_space<vmem>>, %arg2: memref<16x32xbf16, #tpu.memory_space<vmem>>, %arg3: memref<128x32xbf16, #tpu.memory_space<vmem>>) attributes {dimension_semantics = [#tpu.dimension_semantics<parallel>], iteration_bounds = array<i64: 1>, scalar_prefetch = 0 : i64, scratch_operands = 0 : i64, tpu.core_type = #tpu.core_type<tc>, window_params = [{transform_indices = @transform_0, window_bounds = array<i64: 128, 16>}, {pipeline_mode = #tpu.pipeline_mode<synchronous>, transform_indices = @transform_1, window_bounds = array<i64: 16, 32>}, {transform_indices = @transform_2, window_bounds = array<i64: 128, 32>}]} {
    %c0 = arith.constant 0 : index
    %c0_0 = arith.constant 0 : index
    %0 = vector.load %arg1[%c0, %c0_0] : memref<128x16xbf16, #tpu.memory_space<vmem>>, vector<128x16xbf16>
    %c0_1 = arith.constant 0 : index
    %c0_2 = arith.constant 0 : index
    %1 = vector.load %arg2[%c0_1, %c0_2] : memref<16x32xbf16, #tpu.memory_space<vmem>>, vector<16x32xbf16>
    %cst = arith.constant dense<0.000000e+00> : vector<128x32xf32>
    %2 = tpu.matmul %0, %1, %cst {dimension_numbers = #tpu.dot_dimension_numbers<[1], [0], [0], [1], [0, 0, 1, 1], [], []>} : vector<128x16xbf16>, vector<16x32xbf16>, vector<128x32xf32> -> vector<128x32xf32>
    %3 = arith.truncf %2 : vector<128x32xf32> to vector<128x32xbf16>
    %c0_3 = arith.constant 0 : index
    %c0_4 = arith.constant 0 : index
    %4 = vector.load %arg3[%c0_3, %c0_4] : memref<128x32xbf16, #tpu.memory_space<vmem>>, vector<128x32xbf16>
    tpu.vector_store %arg3[%c0_3, %c0_4], %3 {strides = array<i32>} : memref<128x32xbf16, #tpu.memory_space<vmem>>, vector<128x32xbf16>,
    return
  }
  func.func @transform_0(%arg0: i32) -> (i32, i32) {
    %c0_i32 = arith.constant 0 : i32
    %c0_i32_0 = arith.constant 0 : i32
    return %arg0, %c0_i32 : i32, i32
  }
  func.func @transform_1(%arg0: i32) -> (i32, i32) {
    %c0_i32 = arith.constant 0 : i32
    %c0_i32_0 = arith.constant 0 : i32
    %c0_i32_1 = arith.constant 0 : i32
    return %c0_i32, %c0_i32_0 : i32, i32
  }
  func.func @transform_2(%arg0: i32) -> (i32, i32) {
    %c0_i32 = arith.constant 0 : i32
    %c0_i32_0 = arith.constant 0 : i32
    return %arg0, %c0_i32 : i32, i32
  }
}

</mosaic_0001>

<llo_original>
// kernel: tpu_custom_call.1
$region0: #{tpu_custom_call.1}
  #allocation0 [shape = 'u32[]', space=smem, size = 0x4, offset = 0x4, fixed_abs, tag = 'smem constant byte address 0x4 - core index']
  #allocation1 [shape = 'u32[144,128]{1,0:T(1,128)}', space=vmem, size = 0x12000, scoped, tag = 'internal scratch']
  %s0 = inlined_call_operand.vmem [shape: bf16[128,16], index: 0, kind: input, shape index: {}]
  %s1 = inlined_call_operand.vmem [shape: bf16[16,32], index: 1, kind: input, shape index: {}]
  %s2 = inlined_call_operand.vmem [shape: bf16[128,32], index: 2, kind: output, shape index: {}]
  %s3 = sld [smem:[#allocation0]]
  $region18: #{tpu_custom_call.1} parent=0
    _
  %s5 = ssub.s32 1, %s3
  %s6 = scalar_select 0, %s5, %s3
  // Predicated region
  $region2: #{tpu_custom_call.1} parent=0 // pred_check
    _
  $region3: #{tpu_custom_call.1} parent=0 // pred_check_branch
    %8 = sbr.rel (0) target = $region5
  $region4: #{tpu_custom_call.1} parent=0 // pred_region
    _
  $region5: #{tpu_custom_call.1} parent=0 // pred_fallthru
    _
  // Predicated region
  $region6: #{tpu_custom_call.1} parent=0 // pred_check
    _
  $region7: #{tpu_custom_call.1} parent=0 // pred_check_branch
    %10 = sbr.rel (0) target = $region9
  $region8: #{tpu_custom_call.1} parent=0 // pred_region
    _
  $region9: #{tpu_custom_call.1} parent=0 // pred_fallthru
    _
  %v12 = vld [vmem:[%s0] sm:$0xf]
  %v13 = vld [vmem:[%s0 + $0x4] sm:$0xf]
  %v14 = vld [vmem:[%s0 + $0x8] sm:$0xf]
  %v15 = vld [vmem:[%s0 + $0xc] sm:$0xf]
  %v16 = vld [vmem:[%s0 + $0x10] sm:$0xf]
  %v17 = vld [vmem:[%s0 + $0x14] sm:$0xf]
  %v18 = vld [vmem:[%s0 + $0x18] sm:$0xf]
  %v19 = vld [vmem:[%s0 + $0x1c] sm:$0xf]
  %v20 = vld [vmem:[%s0 + $0x20] sm:$0xf]
  %v21 = vld [vmem:[%s0 + $0x24] sm:$0xf]
  %v22 = vld [vmem:[%s0 + $0x28] sm:$0xf]
  %v23 = vld [vmem:[%s0 + $0x2c] sm:$0xf]
  %v24 = vld [vmem:[%s0 + $0x30] sm:$0xf]
  %v25 = vld [vmem:[%s0 + $0x34] sm:$0xf]
  %v26 = vld [vmem:[%s0 + $0x38] sm:$0xf]
  %v27 = vld [vmem:[%s0 + $0x3c] sm:$0xf]
  %v28 = vld [vmem:[%s1] sm:$0xf]
  %v29 = vld [vmem:[%s1 + $0x4] sm:$0xf]
  %v46 = vunpack.c.l.b16 %v12
  %v47 = vunpack.c.l.b16 %v13
  %v48 = vunpack.c.l.b16 %v14
  %v49 = vunpack.c.l.b16 %v15
  %v50 = vunpack.c.l.b16 %v16
  %v51 = vunpack.c.l.b16 %v17
  %v52 = vunpack.c.l.b16 %v18
  %v53 = vunpack.c.l.b16 %v19
  %v54 = vunpack.c.l.b16 %v20
  %v55 = vunpack.c.l.b16 %v21
  %v56 = vunpack.c.l.b16 %v22
  %v57 = vunpack.c.l.b16 %v23
  %v58 = vunpack.c.l.b16 %v24
  %v59 = vunpack.c.l.b16 %v25
  %v60 = vunpack.c.l.b16 %v26
  %v61 = vunpack.c.l.b16 %v27
  %v62 = vpack.c.b16 %v47, %v46
  %v63 = vpack.c.b16 %v49, %v48
  %v64 = vpack.c.b16 %v51, %v50
  %v65 = vpack.c.b16 %v53, %v52
  %v66 = vpack.c.b16 %v55, %v54
  %v67 = vpack.c.b16 %v57, %v56
  %v68 = vpack.c.b16 %v59, %v58
  %v69 = vpack.c.b16 %v61, %v60
  %v72 = vunpack.c.l.b16 %v28
  %v73 = vunpack.c.l.b16 %v29
  %v74 = vpack.c.b16 %v73, %v72
  %vm76 = vcmask 130048
  %v78 = vsel %vm76, %v62, 0
  %v81 = vsel %vm76, %v63, 0
  %v84 = vsel %vm76, %v64, 0
  %v87 = vsel %vm76, %v65, 0
  %v90 = vsel %vm76, %v66, 0
  %v93 = vsel %vm76, %v67, 0
  %v96 = vsel %vm76, %v68, 0
  %v99 = vsel %vm76, %v69, 0
  %101 = vmatprep.subr.bf16.mxu0 0
  %102 = vmatpush1.bf16.msra.mxu0 0
  %103 = vmatprep.subr.bf16.mxu0 0
  %104 = vmatpush1.bf16.msra.mxu0 0
  %105 = vmatprep.subr.bf16.mxu0 0
  %106 = vmatpush1.bf16.msra.mxu0 0
  %107 = vmatprep.subr.bf16.mxu0 0
  %108 = vmatpush1.bf16.msra.mxu0 0
  %109 = vmatprep.subr.bf16.mxu0 0
  %110 = vmatpush1.bf16.msra.mxu0 0
  %111 = vmatprep.subr.bf16.mxu0 0
  %112 = vmatpush1.bf16.msra.mxu0 0
  %113 = vmatprep.subr.bf16.mxu0 0
  %114 = vmatpush1.bf16.msra.mxu0 0
  %115 = vmatprep.subr.bf16.mxu0 0
  %116 = vmatpush1.bf16.msra.mxu0 %v74
  %117 = vmatprep.subr.bf16.mxu0 0
  %118 = vmatpush2.bf16.msra.mxu0 0
  %119 = vmatprep.subr.bf16.mxu0 0
  %120 = vmatpush2.bf16.msra.mxu0 0
  %121 = vmatprep.subr.bf16.mxu0 0
  %122 = vmatpush2.bf16.msra.mxu0 0
  %123 = vmatprep.subr.bf16.mxu0 0
  %124 = vmatpush2.bf16.msra.mxu0 0
  %125 = vmatprep.subr.bf16.mxu0 0
  %126 = vmatpush2.bf16.msra.mxu0 0
  %127 = vmatprep.subr.bf16.mxu0 0
  %128 = vmatpush2.bf16.msra.mxu0 0
  %129 = vmatprep.subr.bf16.mxu0 0
  %130 = vmatpush2.bf16.msra.mxu0 0
  %131 = vmatprep.subr.bf16.mxu0 0
  %132 = vmatpush2.bf16.msra.mxu0 0
  %133 = vmatprep.mubr.bf16.mxu0 0
  %134 = vmatmul.mubr.bf16.gmra.mxu0 %v78
  %v135 = vpop.f32.mrf.mxu0
  %v136 = vadd.f32 0.0, %v135
  %v137 = vpop.f32.mrf.mxu0
  %v138 = vpop.f32.mrf.mxu0
  %v139 = vadd.f32 0.0, %v138
  %v140 = vpop.f32.mrf.mxu0
  %141 = vmatprep.mubr.bf16.mxu0 0
  %142 = vmatmul.mubr.bf16.gmra.mxu0 %v81
  %v143 = vpop.f32.mrf.mxu0
  %v144 = vadd.f32 0.0, %v143
  %v145 = vpop.f32.mrf.mxu0
  %v146 = vpop.f32.mrf.mxu0
  %v147 = vadd.f32 0.0, %v146
  %v148 = vpop.f32.mrf.mxu0
  %149 = vmatprep.mubr.bf16.mxu0 0
  %150 = vmatmul.mubr.bf16.gmra.mxu0 %v84
  %v151 = vpop.f32.mrf.mxu0
  %v152 = vadd.f32 0.0, %v151
  %v153 = vpop.f32.mrf.mxu0
  %v154 = vpop.f32.mrf.mxu0
  %v155 = vadd.f32 0.0, %v154
  %v156 = vpop.f32.mrf.mxu0
  %157 = vmatprep.mubr.bf16.mxu0 0
  %158 = vmatmul.mubr.bf16.gmra.mxu0 %v87
  %v159 = vpop.f32.mrf.mxu0
  %v160 = vadd.f32 0.0, %v159
  %v161 = vpop.f32.mrf.mxu0
  %v162 = vpop.f32.mrf.mxu0
  %v163 = vadd.f32 0.0, %v162
  %v164 = vpop.f32.mrf.mxu0
  %165 = vmatprep.mubr.bf16.mxu0 0
  %166 = vmatmul.mubr.bf16.gmra.mxu0 %v90
  %v167 = vpop.f32.mrf.mxu0
  %v168 = vadd.f32 0.0, %v167
  %v169 = vpop.f32.mrf.mxu0
  %v170 = vpop.f32.mrf.mxu0
  %v171 = vadd.f32 0.0, %v170
  %v172 = vpop.f32.mrf.mxu0
  %173 = vmatprep.mubr.bf16.mxu0 0
  %174 = vmatmul.mubr.bf16.gmra.mxu0 %v93
  %v175 = vpop.f32.mrf.mxu0
  %v176 = vadd.f32 0.0, %v175
  %v177 = vpop.f32.mrf.mxu0
  %v178 = vpop.f32.mrf.mxu0
  %v179 = vadd.f32 0.0, %v178
  %v180 = vpop.f32.mrf.mxu0
  %181 = vmatprep.mubr.bf16.mxu0 0
  %182 = vmatmul.mubr.bf16.gmra.mxu0 %v96
  %v183 = vpop.f32.mrf.mxu0
  %v184 = vadd.f32 0.0, %v183
  %v185 = vpop.f32.mrf.mxu0
  %v186 = vpop.f32.mrf.mxu0
  %v187 = vadd.f32 0.0, %v186
  %v188 = vpop.f32.mrf.mxu0
  %189 = vmatprep.mubr.bf16.mxu0 0
  %190 = vmatmul.mubr.bf16.gmra.mxu0 %v99
  %v191 = vpop.f32.mrf.mxu0
  %v192 = vadd.f32 0.0, %v191
  %v193 = vpop.f32.mrf.mxu0
  %v194 = vpop.f32.mrf.mxu0
  %v195 = vadd.f32 0.0, %v194
  %v196 = vpop.f32.mrf.mxu0
  %197 = vdwg.mxu0
  %v198 = vpack.c.bf16 %v139, %v136
  %v199 = vpack.c.bf16 %v147, %v144
  %v200 = vpack.c.bf16 %v155, %v152
  %v201 = vpack.c.bf16 %v163, %v160
  %v202 = vpack.c.bf16 %v171, %v168
  %v203 = vpack.c.bf16 %v179, %v176
  %v204 = vpack.c.bf16 %v187, %v184
  %v205 = vpack.c.bf16 %v195, %v192
  %v214 = vunpack.c.l.b16 %v198
  %v215 = vunpack.c.h.b16 %v198
  %v216 = vunpack.c.l.b16 %v199
  %v217 = vunpack.c.h.b16 %v199
  %v218 = vunpack.c.l.b16 %v200
  %v219 = vunpack.c.h.b16 %v200
  %v220 = vunpack.c.l.b16 %v201
  %v221 = vunpack.c.h.b16 %v201
  %v222 = vunpack.c.l.b16 %v202
  %v223 = vunpack.c.h.b16 %v202
  %v224 = vunpack.c.l.b16 %v203
  %v225 = vunpack.c.h.b16 %v203
  %v226 = vunpack.c.l.b16 %v204
  %v227 = vunpack.c.h.b16 %v204
  %v228 = vunpack.c.l.b16 %v205
  %v229 = vunpack.c.h.b16 %v205
  %v230 = vpack.c.b16 %v214, %v214
  %v231 = vpack.c.b16 %v215, %v215
  %v232 = vpack.c.b16 %v216, %v216
  %v233 = vpack.c.b16 %v217, %v217
  %v234 = vpack.c.b16 %v218, %v218
  %v235 = vpack.c.b16 %v219, %v219
  %v236 = vpack.c.b16 %v220, %v220
  %v237 = vpack.c.b16 %v221, %v221
  %v238 = vpack.c.b16 %v222, %v222
  %v239 = vpack.c.b16 %v223, %v223
  %v240 = vpack.c.b16 %v224, %v224
  %v241 = vpack.c.b16 %v225, %v225
  %v242 = vpack.c.b16 %v226, %v226
  %v243 = vpack.c.b16 %v227, %v227
  %v244 = vpack.c.b16 %v228, %v228
  %v245 = vpack.c.b16 %v229, %v229
  %vm262 = vcmask 257024
  %263 = vst.msk [vmem:[%s2] sm:$0xf] %vm262, %v230
  %264 = vst.msk [vmem:[%s2 + $0x4] sm:$0xf] %vm262, %v231
  %265 = vst.msk [vmem:[%s2 + $0x8] sm:$0xf] %vm262, %v232
  %266 = vst.msk [vmem:[%s2 + $0xc] sm:$0xf] %vm262, %v233
  %267 = vst.msk [vmem:[%s2 + $0x10] sm:$0xf] %vm262, %v234
  %268 = vst.msk [vmem:[%s2 + $0x14] sm:$0xf] %vm262, %v235
  %269 = vst.msk [vmem:[%s2 + $0x18] sm:$0xf] %vm262, %v236
  %270 = vst.msk [vmem:[%s2 + $0x1c] sm:$0xf] %vm262, %v237
  %271 = vst.msk [vmem:[%s2 + $0x20] sm:$0xf] %vm262, %v238
  %272 = vst.msk [vmem:[%s2 + $0x24] sm:$0xf] %vm262, %v239
  %273 = vst.msk [vmem:[%s2 + $0x28] sm:$0xf] %vm262, %v240
  %274 = vst.msk [vmem:[%s2 + $0x2c] sm:$0xf] %vm262, %v241
  %275 = vst.msk [vmem:[%s2 + $0x30] sm:$0xf] %vm262, %v242
  %276 = vst.msk [vmem:[%s2 + $0x34] sm:$0xf] %vm262, %v243
  %277 = vst.msk [vmem:[%s2 + $0x38] sm:$0xf] %vm262, %v244
  %278 = vst.msk [vmem:[%s2 + $0x3c] sm:$0xf] %vm262, %v245
  // Predicated region
  $region10: #{tpu_custom_call.1} parent=0 // pred_check
    _
  $region11: #{tpu_custom_call.1} parent=0 // pred_check_branch
    %280 = sbr.rel (0) target = $region13
  $region12: #{tpu_custom_call.1} parent=0 // pred_region
    _
  $region13: #{tpu_custom_call.1} parent=0 // pred_fallthru
    _
  // Predicated region
  $region14: #{tpu_custom_call.1} parent=0 // pred_check
    _
  $region15: #{tpu_custom_call.1} parent=0 // pred_check_branch
    %282 = sbr.rel (0) target = $region17
  $region16: #{tpu_custom_call.1} parent=0 // pred_region
    _
  $region17: #{tpu_custom_call.1} parent=0 // pred_fallthru
    _

</llo_original>
